<compile_context>
chip_gen: v6e
topology: v6e:2x2x1
jax: 0.10.0
libtpu: 0.0.40
codegen_flags: <defaults>
</compile_context>

<pallas_src>
import jax
import jax.numpy as jnp
from jax.experimental import pallas as pl
from jax.experimental.pallas import tpu as pltpu


# Below this many output elements the fixed pallas_call overhead dominates;
# plain jnp (fused by XLA) is faster.
_MIN_PALLAS_ELEMS = 256 * 1024

# Tile caps.  Double-buffered footprint = 2 * (tm*2*tl + 2*tm*tl) * 4 B
# = 32*tm*tl bytes -> 16 MiB at (256, 2048): fits every generation's scoped
# VMEM once we raise the limit to 32 MiB (v5e/v6e 128 MiB physical, v7x 64).
_MAX_TM = 256            # sublane-axis tile cap (multiple of 8 when tiled)
_MAX_TL = 2048           # lane-axis tile cap for the *output* width
_SLAB_WIDTHS = (8192, 4096, 2048, 1024, 512, 256)
_VMEM_LIMIT = 32 * 1024 * 1024


def _fused_kernel(x_ref, g0_ref, g1_ref):
    """One contiguous (tm, 2*tl) input tile; de-interleave the taps in VMEM."""
    tl = g0_ref.shape[-1]
    even = x_ref[:, pl.ds(0, tl, stride=2)]   # x[..., 0::2]
    odd = x_ref[:, pl.ds(1, tl, stride=2)]    # x[..., 1::2]
    g0_ref[...] = even - odd                  # Conv1d weight [[1, -1]], stride 2
    g1_ref[...] = odd                         # Conv1d weight [[0,  1]], stride 2


def _split_kernel(even_ref, odd_ref, g0_ref, g1_ref):
    """Fallback: taps already split by the wrapper (stride-2 XLA slices)."""
    even = even_ref[...]
    odd = odd_ref[...]
    g0_ref[...] = even - odd
    g1_ref[...] = odd


def _round_up(v, m):
    return -(-v // m) * m


def _build_slab(x):
    """(N, 1, L) -> contiguous lane-dense 2-D slab (rows, W), W even.

    Reshapes are free (metadata only) because the underlying buffer is
    contiguous; pair (2i, 2i+1) adjacency is preserved since W is even and
    every per-item segment has even length 2*lout.
    """
    n, _, l = x.shape
    lout = l // 2
    x2 = x[:, 0, :2 * lout]                  # free when L is even
    total = n * 2 * lout
    for w in _SLAB_WIDTHS:
        if total % w == 0:
            return x2.reshape(total // w, w), lout
    return x2, lout                          # (N, 2*lout) fallback geometry


def _pick_tiles(rows, wout):
    tm = rows if rows <= _MAX_TM else _MAX_TM
    tl = wout if wout <= _MAX_TL else _MAX_TL
    # Keep >=2 grid blocks so both v7x TensorCores stay busy and the pipeline
    # has something to overlap — only when there is enough work to split.
    if pl.cdiv(rows, tm) * pl.cdiv(wout, tl) == 1:
        if wout >= 256:
            tl = _round_up(-(-wout // 2), 128)      # multiple of 128, < wout
        elif rows >= 16:
            tm = _round_up(-(-rows // 2), 8)        # multiple of 8, < rows
    return tm, tl


# Memoized capability flag: does the lane-stride-2 in-kernel read lower on
# this Mosaic build?  (Never blocks correctness: failures fall back below.)
_fused_supported = None


def _subconv_pallas(x):
    """x: (N, 1, L) -> (g0, g1), each (N, 1, Lout) with Lout = L // 2."""
    global _fused_supported
    n = x.shape[0]
    slab, lout = _build_slab(x)
    rows, w = slab.shape
    wout = w // 2
    tm, tl = _pick_tiles(rows, wout)
    grid = (pl.cdiv(rows, tm), pl.cdiv(wout, tl))

    out_spec = pl.BlockSpec((tm, tl), lambda i, j: (i, j))
    out_shape = (jax.ShapeDtypeStruct((rows, wout), x.dtype),
                 jax.ShapeDtypeStruct((rows, wout), x.dtype))

    g0s = g1s = None
    if _fused_supported is not False:
        try:
            g0s, g1s = pl.pallas_call(
                _fused_kernel,
                grid=grid,
                in_specs=[pl.BlockSpec((tm, 2 * tl), lambda i, j: (i, j))],
                out_specs=(out_spec, out_spec),
                out_shape=out_shape,
                compiler_params=pltpu.CompilerParams(
                    dimension_semantics=("parallel", "parallel"),
                    vmem_limit_bytes=_VMEM_LIMIT,
                ),
            )(slab)
            _fused_supported = True
        except Exception:
            # Lane-strided in-VMEM reads unsupported here: fall back to
            # wrapper-side tap splitting (keeps slab/tile geometry wins).
            _fused_supported = False

    if g0s is None:
        even = slab[:, 0::2]
        odd = slab[:, 1::2]
        g0s, g1s = pl.pallas_call(
            _split_kernel,
            grid=grid,
            in_specs=[out_spec, out_spec],
            out_specs=(out_spec, out_spec),
            out_shape=out_shape,
            compiler_params=pltpu.CompilerParams(
                dimension_semantics=("parallel", "parallel"),
                allow_input_fusion=[True, True],
                vmem_limit_bytes=_VMEM_LIMIT,
            ),
        )(even, odd)

    return g0s.reshape(n, 1, lout), g1s.reshape(n, 1, lout)


def _subconv_jnp(x):
    """Tiny-problem fast path: let XLA fuse the subtraction (no kernel launch)."""
    lout = x.shape[-1] // 2
    even = x[:, :, 0:2 * lout:2]
    odd = x[:, :, 1:2 * lout:2]
    return even - odd, odd


def subtraction_module_optimized(value_list, *, min_pallas_elems=_MIN_PALLAS_ELEMS):
    """value_list: list of (jnp.ndarray of shape (1, 1, L), tag: str).

    Returns [(g0_slice, '0'+tag), (g1_slice, '1'+tag), ...] per input item,
    mirroring the PyTorch module.
    """
    # TODO(synk): a per-item kernel launch would avoid the concat's extra HBM
    # pass when items are few and huge; kept to mirror the module's torch.cat.
    x = jnp.concatenate([m for m, _ in value_list], axis=0)   # (N, 1, L)
    if x.shape[1] != 1:
        raise ValueError("Conv1d(1, 1, kernel=2) expects a single input channel")
    n, _, l = x.shape
    if n * (l // 2) >= min_pallas_elems:
        g0, g1 = _subconv_pallas(x)
    else:
        g0, g1 = _subconv_jnp(x)
    res = []
    for idx in range(len(value_list)):
        res.append((g0[idx:idx + 1], '0' + value_list[idx][1]))
        res.append((g1[idx:idx + 1], '1' + value_list[idx][1]))
    return res


def _reference(x):
    lout = x.shape[-1] // 2
    even = x[:, :, 0:2 * lout:2]
    odd = x[:, :, 1:2 * lout:2]
    return even - odd, odd


if __name__ == "__main__":
    key = jax.random.PRNGKey(0)
    ok = True

    # --- Module-consistent inputs: N=3 items of shape (1, 1, 16).
    L = 16
    n_items = 3
    keys = jax.random.split(key, n_items + 1)
    value_list = [
        (jax.random.normal(keys[i], (1, 1, L), dtype=jnp.float32), f"tag{i}")
        for i in range(n_items)
    ]

    res = subtraction_module_optimized(value_list)                        # jnp path
    res_p = subtraction_module_optimized(value_list, min_pallas_elems=0)  # Pallas path
    for r in (res, res_p):
        for t, _ in r:
            jax.block_until_ready(t)

    x = jnp.concatenate([m for m, _ in value_list], axis=0)
    ref_g0, ref_g1 = _reference(x)
    for idx in range(n_items):
        for r in (res, res_p):
            ok &= bool(jnp.allclose(r[2 * idx][0], ref_g0[idx:idx + 1], atol=1e-6))
            ok &= bool(jnp.allclose(r[2 * idx + 1][0], ref_g1[idx:idx + 1], atol=1e-6))
            ok &= r[2 * idx][1] == ('0' + f"tag{idx}")
            ok &= r[2 * idx + 1][1] == ('1' + f"tag{idx}")

    # --- Exercise the flattened-slab / tiled Pallas path directly on slightly
    # larger (still small) shapes, including unaligned widths and odd L.
    for (nb, lb) in ((8, 8192), (5, 270), (3, 257)):
        xb = jax.random.normal(keys[-1], (nb, 1, lb), dtype=jnp.float32)
        g0, g1 = _subconv_pallas(xb)
        jax.block_until_ready(g0)
        jax.block_until_ready(g1)
        rg0, rg1 = _reference(xb)
        ok &= bool(jnp.allclose(g0, rg0, atol=1e-6))
        ok &= bool(jnp.allclose(g1, rg1, atol=1e-6))

    if ok:
        print("KERNEL_OK")
</pallas_src>

<mosaic_0001>
module attributes {stable_mosaic.version = 11 : i64} {
  func.func @_fused_kernel(%arg0: i32, %arg1: i32, %arg2: memref<3x16xf32, #tpu.memory_space<vmem>>, %arg3: memref<3x8xf32, #tpu.memory_space<vmem>>, %arg4: memref<3x8xf32, #tpu.memory_space<vmem>>) attributes {dimension_semantics = [#tpu.dimension_semantics<parallel>, #tpu.dimension_semantics<parallel>], iteration_bounds = array<i64: 1, 1>, scalar_prefetch = 0 : i64, scratch_operands = 0 : i64, tpu.core_type = #tpu.core_type<tc>, window_params = [{transform_indices = @transform_0, window_bounds = array<i64: 3, 16>}, {transform_indices = @transform_1, window_bounds = array<i64: 3, 8>}, {transform_indices = @transform_2, window_bounds = array<i64: 3, 8>}]} {
    %c0 = arith.constant 0 : index
    %c0_0 = arith.constant 0 : index
    %0 = tpu.strided_load %arg2[%c0, %c0_0] {strides = array<i32: 1, 2>} : memref<3x16xf32, #tpu.memory_space<vmem>>, vector<3x8xf32>
    %c0_1 = arith.constant 0 : index
    %c1 = arith.constant 1 : index
    %1 = tpu.strided_load %arg2[%c0_1, %c1] {strides = array<i32: 1, 2>} : memref<3x16xf32, #tpu.memory_space<vmem>>, vector<3x8xf32>
    %2 = arith.subf %0, %1 : vector<3x8xf32>
    %c0_2 = arith.constant 0 : index
    %c0_3 = arith.constant 0 : index
    %3 = vector.load %arg3[%c0_2, %c0_3] : memref<3x8xf32, #tpu.memory_space<vmem>>, vector<3x8xf32>
    tpu.vector_store %arg3[%c0_2, %c0_3], %2 {strides = array<i32>} : memref<3x8xf32, #tpu.memory_space<vmem>>, vector<3x8xf32>,
    %c0_4 = arith.constant 0 : index
    %c0_5 = arith.constant 0 : index
    %4 = vector.load %arg4[%c0_4, %c0_5] : memref<3x8xf32, #tpu.memory_space<vmem>>, vector<3x8xf32>
    tpu.vector_store %arg4[%c0_4, %c0_5], %1 {strides = array<i32>} : memref<3x8xf32, #tpu.memory_space<vmem>>, vector<3x8xf32>,
    return
  }
  func.func @transform_0(%arg0: i32, %arg1: i32) -> (i32, i32) {
    %c0_i32 = arith.constant 0 : i32
    return %arg0, %arg1 : i32, i32
  }
  func.func @transform_1(%arg0: i32, %arg1: i32) -> (i32, i32) {
    %c0_i32 = arith.constant 0 : i32
    return %arg0, %arg1 : i32, i32
  }
  func.func @transform_2(%arg0: i32, %arg1: i32) -> (i32, i32) {
    %c0_i32 = arith.constant 0 : i32
    return %arg0, %arg1 : i32, i32
  }
}

module attributes {stable_mosaic.version = 11 : i64} {
  func.func @_split_kernel(%arg0: i32, %arg1: i32, %arg2: memref<3x8xf32, #tpu.memory_space<vmem>>, %arg3: memref<3x8xf32, #tpu.memory_space<vmem>>, %arg4: memref<3x8xf32, #tpu.memory_space<vmem>>, %arg5: memref<3x8xf32, #tpu.memory_space<vmem>>) attributes {dimension_semantics = [#tpu.dimension_semantics<parallel>, #tpu.dimension_semantics<parallel>], iteration_bounds = array<i64: 1, 1>, scalar_prefetch = 0 : i64, scratch_operands = 0 : i64, tpu.core_type = #tpu.core_type<tc>, window_params = [{transform_indices = @transform_0, window_bounds = array<i64: 3, 8>}, {transform_indices = @transform_1, window_bounds = array<i64: 3, 8>}, {transform_indices = @transform_2, window_bounds = array<i64: 3, 8>}, {transform_indices = @transform_3, window_bounds = array<i64: 3, 8>}]} {
    %c0 = arith.constant 0 : index
    %c0_0 = arith.constant 0 : index
    %0 = vector.load %arg2[%c0, %c0_0] : memref<3x8xf32, #tpu.memory_space<vmem>>, vector<3x8xf32>
    %c0_1 = arith.constant 0 : index
    %c0_2 = arith.constant 0 : index
    %1 = vector.load %arg3[%c0_1, %c0_2] : memref<3x8xf32, #tpu.memory_space<vmem>>, vector<3x8xf32>
    %2 = arith.subf %0, %1 : vector<3x8xf32>
    %c0_3 = arith.constant 0 : index
    %c0_4 = arith.constant 0 : index
    %3 = vector.load %arg4[%c0_3, %c0_4] : memref<3x8xf32, #tpu.memory_space<vmem>>, vector<3x8xf32>
    tpu.vector_store %arg4[%c0_3, %c0_4], %2 {strides = array<i32>} : memref<3x8xf32, #tpu.memory_space<vmem>>, vector<3x8xf32>,
    %c0_5 = arith.constant 0 : index
    %c0_6 = arith.constant 0 : index
    %4 = vector.load %arg5[%c0_5, %c0_6] : memref<3x8xf32, #tpu.memory_space<vmem>>, vector<3x8xf32>
    tpu.vector_store %arg5[%c0_5, %c0_6], %1 {strides = array<i32>} : memref<3x8xf32, #tpu.memory_space<vmem>>, vector<3x8xf32>,
    return
  }
  func.func @transform_0(%arg0: i32, %arg1: i32) -> (i32, i32) {
    %c0_i32 = arith.constant 0 : i32
    return %arg0, %arg1 : i32, i32
  }
  func.func @transform_1(%arg0: i32, %arg1: i32) -> (i32, i32) {
    %c0_i32 = arith.constant 0 : i32
    return %arg0, %arg1 : i32, i32
  }
  func.func @transform_2(%arg0: i32, %arg1: i32) -> (i32, i32) {
    %c0_i32 = arith.constant 0 : i32
    return %arg0, %arg1 : i32, i32
  }
  func.func @transform_3(%arg0: i32, %arg1: i32) -> (i32, i32) {
    %c0_i32 = arith.constant 0 : i32
    return %arg0, %arg1 : i32, i32
  }
}

</mosaic_0001>

<llo_original>
// kernel: tpu_custom_call.1
$region0: #{tpu_custom_call.1}
  #allocation0 [shape = 'u32[]', space=smem, size = 0x4, offset = 0x4, fixed_abs, tag = 'smem constant byte address 0x4 - core index']
  #allocation1 [shape = 'u32[144,128]{1,0:T(1,128)}', space=vmem, size = 0x12000, scoped, tag = 'internal scratch']
  %s0 = inlined_call_operand.hbm [shape: f32[3,8], index: 0, kind: input, shape index: {}]
  %s1 = inlined_call_operand.hbm [shape: f32[3,8], index: 1, kind: input, shape index: {}]
  %s2 = inlined_call_operand.hbm [shape: f32[3,8], index: 2, kind: output, shape index: {0}]
  %s3 = inlined_call_operand.hbm [shape: f32[3,8], index: 3, kind: output, shape index: {1}]
  %4 = xla_tuple %s2, %s3
  %s5 = sld [smem:[#allocation0]]
  $region34: #{tpu_custom_call.1} parent=0
    _
  %s7 = ssub.s32 1, %s5
  %s8 = scalar_select 0, %s7, %s5
  $region1: #{tpu_custom_call.1} parent=0
    #allocation2 [shape = 'u8[2048]{0}', space=vmem, size = 0x800, scoped, tag = 'input window, operand 0, single buffered']
    #allocation3 [shape = 's32[1]{0}', space=sflag, size = 0x4, scoped, tag = 'scoped memory for tpu_custom_call.1']
    #allocation4 [shape = 's32[1]{0}', space=sflag, size = 0x4, scoped, tag = 'scoped memory for tpu_custom_call.1']
    #allocation5 [shape = 'u8[2048]{0}', space=vmem, size = 0x800, scoped, tag = 'input window, operand 1, single buffered']
    #allocation6 [shape = 's32[1]{0}', space=sflag, size = 0x4, scoped, tag = 'scoped memory for tpu_custom_call.1']
    #allocation7 [shape = 'u8[2048]{0}', space=vmem, size = 0x800, scoped, tag = 'output window, operand 0, single buffered']
    #allocation8 [shape = 'u8[2048]{0}', space=vmem, size = 0x800, scoped, tag = 'output window, operand 1, single buffered']
    #allocation9 [shape = 's32[1]{0}', space=sflag, size = 0x4, scoped, tag = 'scoped memory for tpu_custom_call.1']
    %9 = vsyncpa [#allocation3], 0
    %10 = vsyncpa [#allocation6], 0
    %11 = vsyncpa [#allocation4], 0
    %12 = vsyncpa [#allocation9], 0
    // Predicated region
    $region2: #{tpu_custom_call.1} parent=1 // pred_check
      _
    $region3: #{tpu_custom_call.1} parent=1 // pred_check_branch
      %14 = sbr.rel (0) target = $region5
    $region4: #{tpu_custom_call.1} parent=1 // pred_region
      %s16 = ssub.s32 64, 64
      %17 = vsyncadd [#allocation3], %s16
      %s19 = sshll.u32 [#allocation2], 4
      %s20 = int_to_ptr.vmem [resolvable:$true] %s19
      %22 = dma.hbm_to_vmem [thread:$0]  %s0, 64, %s20, [#allocation3]
    $region5: #{tpu_custom_call.1} parent=1 // pred_fallthru
      _
    // Predicated region
    $region6: #{tpu_custom_call.1} parent=1 // pred_check
      _
    $region7: #{tpu_custom_call.1} parent=1 // pred_check_branch
      %24 = sbr.rel (0) target = $region9
    $region8: #{tpu_custom_call.1} parent=1 // pred_region
      %s26 = ssub.s32 64, 64
      %27 = vsyncadd [#allocation6], %s26
      %s29 = sshll.u32 [#allocation5], 4
      %s30 = int_to_ptr.vmem [resolvable:$true] %s29
      %32 = dma.hbm_to_vmem [thread:$0]  %s1, 64, %s30, [#allocation6]
    $region9: #{tpu_custom_call.1} parent=1 // pred_fallthru
      _
    // Predicated region
    $region10: #{tpu_custom_call.1} parent=1 // pred_check
      _
    $region11: #{tpu_custom_call.1} parent=1 // pred_check_branch
      %34 = sbr.rel (0) target = $region13
    $region12: #{tpu_custom_call.1} parent=1 // pred_region
      %35 = dma.done [#allocation3], 64
    $region13: #{tpu_custom_call.1} parent=1 // pred_fallthru
      _
    // Predicated region
    $region14: #{tpu_custom_call.1} parent=1 // pred_check
      _
    $region15: #{tpu_custom_call.1} parent=1 // pred_check_branch
      %37 = sbr.rel (0) target = $region17
    $region16: #{tpu_custom_call.1} parent=1 // pred_region
      %38 = dma.done [#allocation6], 64
    $region17: #{tpu_custom_call.1} parent=1 // pred_fallthru
      _
    %v39 = vld [vmem:[#allocation2] sm:$0x7]
    %v40 = vld [vmem:[#allocation5] sm:$0x7]
    %v41 = vsub.f32 %v39, %v40
    %vm42 = vcmask 59392
    %43 = vst.msk [vmem:[#allocation7] sm:$0x7] %vm42, %v41
    %44 = vst.msk [vmem:[#allocation8] sm:$0x7] %vm42, %v40
    // Predicated region
    $region18: #{tpu_custom_call.1} parent=1 // pred_check
      _
    $region19: #{tpu_custom_call.1} parent=1 // pred_check_branch
      %46 = sbr.rel (0) target = $region21
    $region20: #{tpu_custom_call.1} parent=1 // pred_region
      %s48 = ssub.s32 64, 64
      %49 = vsyncadd [#allocation4], %s48
      %s51 = sshll.u32 [#allocation7], 4
      %s52 = int_to_ptr.vmem [resolvable:$true] %s51
      %54 = dma.vmem_to_hbm [thread:$0]  %s52, 64, %s2, [#allocation4]
    $region21: #{tpu_custom_call.1} parent=1 // pred_fallthru
      _
    // Predicated region
    $region22: #{tpu_custom_call.1} parent=1 // pred_check
      _
    $region23: #{tpu_custom_call.1} parent=1 // pred_check_branch
      %56 = sbr.rel (0) target = $region25
    $region24: #{tpu_custom_call.1} parent=1 // pred_region
      %s58 = ssub.s32 64, 64
      %59 = vsyncadd [#allocation9], %s58
      %s61 = sshll.u32 [#allocation8], 4
      %s62 = int_to_ptr.vmem [resolvable:$true] %s61
      %64 = dma.vmem_to_hbm [thread:$0]  %s62, 64, %s3, [#allocation9]
    $region25: #{tpu_custom_call.1} parent=1 // pred_fallthru
      _
    // Predicated region
    $region26: #{tpu_custom_call.1} parent=1 // pred_check
      _
    $region27: #{tpu_custom_call.1} parent=1 // pred_check_branch
      %66 = sbr.rel (0) target = $region29
    $region28: #{tpu_custom_call.1} parent=1 // pred_region
      %67 = dma.done [#allocation4], 64
    $region29: #{tpu_custom_call.1} parent=1 // pred_fallthru
      _
    // Predicated region
    $region30: #{tpu_custom_call.1} parent=1 // pred_check
      _
    $region31: #{tpu_custom_call.1} parent=1 // pred_check_branch
      %69 = sbr.rel (0) target = $region33
    $region32: #{tpu_custom_call.1} parent=1 // pred_region
      %70 = dma.done [#allocation9], 64
    $region33: #{tpu_custom_call.1} parent=1 // pred_fallthru
      _
    %71 = vsyncpa [#allocation3], 1
    %72 = vsyncpa [#allocation6], 1
    %73 = vsyncpa [#allocation4], 1
    %74 = vsyncpa [#allocation9], 1

</llo_original>
